<compile_context>
chip_gen: v6e
topology: v6e:2x2x1
jax: 0.10.0
libtpu: 0.0.40
codegen_flags: <defaults>
</compile_context>

<pallas_src>
import functools

import jax
import jax.numpy as jnp
from jax import lax
from jax.experimental import pallas as pl
from jax.experimental.pallas import tpu as pltpu


def _round_up(v: int, m: int) -> int:
    return (v + m - 1) // m * m


def _smooth_loss_kernel(x_ref, row_ref, col_ref, out_ref, *,
                        ks, alpha, neg_tap, h_true, w_true):
    """One (batch, channel-tile) block -> one (8, W_pad) partial-sum block."""
    x = x_ref[...].astype(jnp.float32)            # (C_TILE, H_pad, W_pad)
    _, h, w = x.shape
    half = ks // 2

    pad_h, pad_w = h - h_true, w - w_true
    # If the wrapper's zero padding gives >= ks//2 rows/cols of slack, the
    # roll wrap-around lands entirely inside the (masked-out) padding and the
    # per-shift boundary masks can be skipped.
    edge_h, edge_w = pad_h < half, pad_w < half

    row = row_ref[...] if (edge_h or pad_h) else None   # (1, H_pad, 1) int32
    col = col_ref[...] if (edge_w or pad_w) else None   # (1, 1, W_pad) int32

    def shifted(v, off, axis, pos, need_mask):
        # y[..., i, ...] = v[..., i + off, ...], zero outside [0, size).
        size = v.shape[axis]
        rolled = pltpu.roll(v, shift=(-off) % size, axis=axis)
        if not need_mask:
            return rolled                        # wrap lands in masked padding
        mask = (pos < size - off) if off > 0 else (pos >= -off)
        return jnp.where(mask, rolled, 0.0)

    # Off-centre taps are all -1/(ks-1): sum the shifted neighbours once and
    # fold the tap into a single multiply per axis (saves ks-2 vmuls/axis).
    nb_w = None
    nb_h = None
    for k in range(1, half + 1):
        for off in (k, -k):
            sw = shifted(x, off, 2, col, edge_w)
            sh = shifted(x, off, 1, row, edge_h)
            nb_w = sw if nb_w is None else nb_w + sw
            nb_h = sh if nb_h is None else nb_h + sh
    dx = x + neg_tap * nb_w
    dy = x + neg_tap * nb_h

    if alpha == 1:
        term = jnp.abs(dx) + jnp.abs(dy)
    elif alpha == 2:
        term = dx * dx + dy * dy                  # |d|^2 == d^2, no abs/pow
    elif isinstance(alpha, int) and alpha % 2 == 0:
        term = dx ** alpha + dy ** alpha
    else:
        term = jnp.abs(dx) ** alpha + jnp.abs(dy) ** alpha

    # Padded rows / columns must not contribute to the mean.
    if pad_w:
        term = jnp.where(col < w_true, term, 0.0)
    if pad_h:
        term = jnp.where(row < h_true, term, 0.0)

    # Lane-resident partial sum: channel sum + sublane-group sum are pure VPU
    # adds; the (8, W_pad) store is a single unmasked lane-dense vst.
    plane = term.sum(axis=0)                      # (H_pad, W_pad)
    out_ref[...] = plane.reshape(-1, 8, w).sum(axis=0)


def smooth_loss(x, *, ks=3, alpha=1):
    """Scalar loss == Smooth_Loss(channels=C, ks, alpha)(x) from PyTorch."""
    if x.ndim != 4:
        raise ValueError("expected NCHW input")
    if ks < 3 or ks % 2 == 0:
        raise ValueError("ks must be an odd integer >= 3 (ks=1 divides by zero "
                         "in the module; even ks changes the output size).")
    N, C, H, W = map(int, x.shape)
    neg_tap = -1.0 / (ks - 1)

    # Spatial padding for vreg alignment (sublanes % 8, lanes % 128).
    H_pad = _round_up(H, 8)
    W_pad = _round_up(W, 128)

    # Halo-free channel tiling: target ~4 MiB of f32 working plane per step.
    plane_f32_bytes = H_pad * W_pad * 4
    target_f32_bytes = 4 * 1024 * 1024
    c_tile = int(max(1, min(C, target_f32_bytes // plane_f32_bytes)))
    C_pad = _round_up(C, c_tile)
    n_cblk = C_pad // c_tile

    pads = ((0, 0), (0, C_pad - C), (0, H_pad - H), (0, W_pad - W))
    if any(p != (0, 0) for p in pads):
        x = jnp.pad(x, pads)

    # Tiny resident index vectors used for boundary / validity masks.
    row_idx = jnp.arange(H_pad, dtype=jnp.int32).reshape(1, H_pad, 1)
    col_idx = jnp.arange(W_pad, dtype=jnp.int32).reshape(1, 1, W_pad)

    kernel = functools.partial(_smooth_loss_kernel, ks=ks, alpha=alpha,
                               neg_tap=neg_tap, h_true=H, w_true=W)

    in_block_bytes = c_tile * H_pad * W_pad * x.dtype.itemsize
    f32_block_bytes = c_tile * plane_f32_bytes
    # 2x double-buffered input + ~6 full-size f32 temporaries + slack; stays
    # well below v7x's 64 MiB physical VMEM (v5e/v6e have 128 MiB).
    vmem_limit = int(min(48 * 1024 * 1024,
                         max(16 * 1024 * 1024,
                             2 * in_block_bytes + 6 * f32_block_bytes + (1 << 20))))

    partials = pl.pallas_call(
        kernel,
        out_shape=jax.ShapeDtypeStruct((N, n_cblk, 8, W_pad), jnp.float32),
        grid_spec=pltpu.PrefetchScalarGridSpec(
            num_scalar_prefetch=0,
            grid=(N, n_cblk),
            in_specs=[
                pl.BlockSpec((None, c_tile, H_pad, W_pad),
                             lambda n, c: (n, c, 0, 0)),
                pl.BlockSpec((1, H_pad, 1), lambda n, c: (0, 0, 0)),
                pl.BlockSpec((1, 1, W_pad), lambda n, c: (0, 0, 0)),
            ],
            out_specs=pl.BlockSpec((None, None, 8, W_pad),
                                   lambda n, c: (n, c, 0, 0)),
        ),
        compiler_params=pltpu.CompilerParams(
            dimension_semantics=("parallel", "parallel"),
            vmem_limit_bytes=vmem_limit,
        ),
    )(x, row_idx, col_idx)

    return jnp.sum(partials) * jnp.float32(1.0 / (N * C * H * W))


def smooth_loss_ref(x, ks=3, alpha=1):
    """Pure-JAX reference of the PyTorch forward."""
    pad = ks // 2
    taps = jnp.full((ks,), -1.0 / (ks - 1), dtype=jnp.float32).at[pad].set(1.0)
    N, C, H, W = x.shape
    xf = x.astype(jnp.float32)
    xp = jnp.pad(xf, ((0, 0), (0, 0), (0, 0), (pad, pad)))
    yp = jnp.pad(xf, ((0, 0), (0, 0), (pad, pad), (0, 0)))
    dx = sum(taps[t] * xp[..., :, t:t + W] for t in range(ks))
    dy = sum(taps[t] * yp[..., t:t + H, :] for t in range(ks))
    return jnp.mean(jnp.abs(dx) ** alpha + jnp.abs(dy) ** alpha)


if __name__ == "__main__":
    key = jax.random.PRNGKey(0)
    x = jax.random.normal(key, (2, 4, 16, 16), dtype=jnp.float32)

    out1 = jax.block_until_ready(smooth_loss(x, ks=3, alpha=1))
    ref1 = smooth_loss_ref(x, ks=3, alpha=1)
    assert jnp.allclose(out1, ref1, atol=1e-5, rtol=1e-4), (out1, ref1)

    out2 = jax.block_until_ready(smooth_loss(x, ks=3, alpha=2))
    ref2 = smooth_loss_ref(x, ks=3, alpha=2)
    assert jnp.allclose(out2, ref2, atol=1e-5, rtol=1e-4), (out2, ref2)

    # Unaligned spatial dims exercise the wrapper padding + validity masks.
    x3 = jax.random.normal(jax.random.PRNGKey(1), (1, 3, 12, 20),
                           dtype=jnp.float32)
    out3 = jax.block_until_ready(smooth_loss(x3, ks=3, alpha=1))
    ref3 = smooth_loss_ref(x3, ks=3, alpha=1)
    assert jnp.allclose(out3, ref3, atol=1e-5, rtol=1e-4), (out3, ref3)

    print("KERNEL_OK")
</pallas_src>

<mosaic_0001>
module attributes {stable_mosaic.version = 11 : i64} {
  func.func @_smooth_loss_kernel(%arg0: i32, %arg1: i32, %arg2: memref<1x4x16x128xf32, #tpu.memory_space<vmem>>, %arg3: memref<1x16x1xi32, #tpu.memory_space<vmem>>, %arg4: memref<1x1x128xi32, #tpu.memory_space<vmem>>, %arg5: memref<1x1x8x128xf32, #tpu.memory_space<vmem>>) attributes {dimension_semantics = [#tpu.dimension_semantics<parallel>, #tpu.dimension_semantics<parallel>], iteration_bounds = array<i64: 2, 1>, scalar_prefetch = 0 : i64, scratch_operands = 0 : i64, tpu.core_type = #tpu.core_type<tc>, window_params = [{transform_indices = @transform_0, window_bounds = array<i64: 1, 4, 16, 128>}, {pipeline_mode = #tpu.pipeline_mode<synchronous>, transform_indices = @transform_1, window_bounds = array<i64: 1, 16, 1>}, {pipeline_mode = #tpu.pipeline_mode<synchronous>, transform_indices = @transform_2, window_bounds = array<i64: 1, 1, 128>}, {transform_indices = @transform_3, window_bounds = array<i64: 1, 1, 8, 128>}]} {
    %c0 = arith.constant 0 : index
    %c0_0 = arith.constant 0 : index
    %c0_1 = arith.constant 0 : index
    %c0_2 = arith.constant 0 : index
    %0 = vector.load %arg2[%c0, %c0_0, %c0_1, %c0_2] : memref<1x4x16x128xf32, #tpu.memory_space<vmem>>, vector<1x4x16x128xf32>
    %1 = vector.shape_cast %0 : vector<1x4x16x128xf32> to vector<4x16x128xf32>
    %c0_3 = arith.constant 0 : index
    %c0_4 = arith.constant 0 : index
    %c0_5 = arith.constant 0 : index
    %2 = vector.load %arg3[%c0_3, %c0_4, %c0_5] : memref<1x16x1xi32, #tpu.memory_space<vmem>>, vector<1x16x1xi32>
    %c0_6 = arith.constant 0 : index
    %c0_7 = arith.constant 0 : index
    %c0_8 = arith.constant 0 : index
    %3 = vector.load %arg4[%c0_6, %c0_7, %c0_8] : memref<1x1x128xi32, #tpu.memory_space<vmem>>, vector<1x1x128xi32>
    %c127_i32 = arith.constant 127 : i32
    %4 = tpu.dynamic_rotate %1 by %c127_i32 dim 2 : vector<4x16x128xf32>, i32 -> vector<4x16x128xf32>
    %c15_i32 = arith.constant 15 : i32
    %5 = tpu.dynamic_rotate %1 by %c15_i32 dim 1 : vector<4x16x128xf32>, i32 -> vector<4x16x128xf32>
    %c15_i32_9 = arith.constant 15 : i32
    %6 = vector.broadcast %c15_i32_9 : i32 to vector<1x16x1xi32>
    %7 = arith.cmpi slt, %2, %6 : vector<1x16x1xi32>
    %cst = arith.constant 0.000000e+00 : f32
    %8 = vector.shape_cast %7 : vector<1x16x1xi1> to vector<1x16x1xi1>
    %9 = vector.broadcast %8 : vector<1x16x1xi1> to vector<4x16x128xi1>
    %10 = vector.broadcast %cst : f32 to vector<4x16x128xf32>
    %11 = arith.select %9, %5, %10 : vector<4x16x128xi1>, vector<4x16x128xf32>
    %c1_i32 = arith.constant 1 : i32
    %12 = tpu.dynamic_rotate %1 by %c1_i32 dim 2 : vector<4x16x128xf32>, i32 -> vector<4x16x128xf32>
    %c1_i32_10 = arith.constant 1 : i32
    %13 = tpu.dynamic_rotate %1 by %c1_i32_10 dim 1 : vector<4x16x128xf32>, i32 -> vector<4x16x128xf32>
    %c1_i32_11 = arith.constant 1 : i32
    %14 = vector.broadcast %c1_i32_11 : i32 to vector<1x16x1xi32>
    %15 = arith.cmpi sge, %2, %14 : vector<1x16x1xi32>
    %cst_12 = arith.constant 0.000000e+00 : f32
    %16 = vector.shape_cast %15 : vector<1x16x1xi1> to vector<1x16x1xi1>
    %17 = vector.broadcast %16 : vector<1x16x1xi1> to vector<4x16x128xi1>
    %18 = vector.broadcast %cst_12 : f32 to vector<4x16x128xf32>
    %19 = arith.select %17, %13, %18 : vector<4x16x128xi1>, vector<4x16x128xf32>
    %20 = arith.addf %4, %12 : vector<4x16x128xf32>
    %21 = arith.addf %11, %19 : vector<4x16x128xf32>
    %cst_13 = arith.constant -5.000000e-01 : f32
    %22 = vector.broadcast %cst_13 : f32 to vector<4x16x128xf32>
    %23 = arith.mulf %22, %20 : vector<4x16x128xf32>
    %24 = arith.addf %1, %23 : vector<4x16x128xf32>
    %cst_14 = arith.constant -5.000000e-01 : f32
    %25 = vector.broadcast %cst_14 : f32 to vector<4x16x128xf32>
    %26 = arith.mulf %25, %21 : vector<4x16x128xf32>
    %27 = arith.addf %1, %26 : vector<4x16x128xf32>
    %28 = math.absf %24 : vector<4x16x128xf32>
    %29 = math.absf %27 : vector<4x16x128xf32>
    %30 = arith.addf %28, %29 : vector<4x16x128xf32>
    %c16_i32 = arith.constant 16 : i32
    %31 = vector.broadcast %c16_i32 : i32 to vector<1x1x128xi32>
    %32 = arith.cmpi slt, %3, %31 : vector<1x1x128xi32>
    %cst_15 = arith.constant 0.000000e+00 : f32
    %33 = vector.shape_cast %32 : vector<1x1x128xi1> to vector<1x1x128xi1>
    %34 = vector.broadcast %33 : vector<1x1x128xi1> to vector<4x16x128xi1>
    %35 = vector.broadcast %cst_15 : f32 to vector<4x16x128xf32>
    %36 = arith.select %34, %30, %35 : vector<4x16x128xi1>, vector<4x16x128xf32>
    %cst_16 = arith.constant dense<0.000000e+00> : vector<16x128xf32>
    %37 = vector.multi_reduction <add>, %36, %cst_16 [0] : vector<4x16x128xf32> to vector<16x128xf32>
    %38 = vector.shape_cast %37 : vector<16x128xf32> to vector<2x8x128xf32>
    %cst_17 = arith.constant dense<0.000000e+00> : vector<8x128xf32>
    %39 = vector.multi_reduction <add>, %38, %cst_17 [0] : vector<2x8x128xf32> to vector<8x128xf32>
    %c0_18 = arith.constant 0 : index
    %c0_19 = arith.constant 0 : index
    %c0_20 = arith.constant 0 : index
    %c0_21 = arith.constant 0 : index
    %40 = vector.load %arg5[%c0_18, %c0_19, %c0_20, %c0_21] : memref<1x1x8x128xf32, #tpu.memory_space<vmem>>, vector<1x1x8x128xf32>
    %41 = vector.shape_cast %40 : vector<1x1x8x128xf32> to vector<8x128xf32>
    %42 = vector.shape_cast %39 : vector<8x128xf32> to vector<1x1x8x128xf32>
    tpu.vector_store %arg5[%c0_18, %c0_19, %c0_20, %c0_21], %42 {strides = array<i32>} : memref<1x1x8x128xf32, #tpu.memory_space<vmem>>, vector<1x1x8x128xf32>,
    return
  }
  func.func @transform_0(%arg0: i32, %arg1: i32) -> (i32, i32, i32, i32) {
    %c0_i32 = arith.constant 0 : i32
    %c0_i32_0 = arith.constant 0 : i32
    %c0_i32_1 = arith.constant 0 : i32
    return %arg0, %arg1, %c0_i32, %c0_i32_0 : i32, i32, i32, i32
  }
  func.func @transform_1(%arg0: i32, %arg1: i32) -> (i32, i32, i32) {
    %c0_i32 = arith.constant 0 : i32
    %c0_i32_0 = arith.constant 0 : i32
    %c0_i32_1 = arith.constant 0 : i32
    %c0_i32_2 = arith.constant 0 : i32
    return %c0_i32, %c0_i32_0, %c0_i32_1 : i32, i32, i32
  }
  func.func @transform_2(%arg0: i32, %arg1: i32) -> (i32, i32, i32) {
    %c0_i32 = arith.constant 0 : i32
    %c0_i32_0 = arith.constant 0 : i32
    %c0_i32_1 = arith.constant 0 : i32
    %c0_i32_2 = arith.constant 0 : i32
    return %c0_i32, %c0_i32_0, %c0_i32_1 : i32, i32, i32
  }
  func.func @transform_3(%arg0: i32, %arg1: i32) -> (i32, i32, i32, i32) {
    %c0_i32 = arith.constant 0 : i32
    %c0_i32_0 = arith.constant 0 : i32
    %c0_i32_1 = arith.constant 0 : i32
    return %arg0, %arg1, %c0_i32, %c0_i32_0 : i32, i32, i32, i32
  }
}

</mosaic_0001>

<llo_original>
// kernel: tpu_custom_call.1
$region0: #{tpu_custom_call.1}
  #allocation0 [shape = 'u32[]', space=smem, size = 0x4, offset = 0x4, fixed_abs, tag = 'smem constant byte address 0x4 - core index']
  #allocation1 [shape = 'u32[144,128]{1,0:T(1,128)}', space=vmem, size = 0x12000, scoped, tag = 'internal scratch']
  %s0 = inlined_call_operand.hbm [shape: f32[2,4,16,128], index: 0, kind: input, shape index: {}]
  %s1 = inlined_call_operand.vmem [shape: s32[1,16,1], index: 1, kind: input, shape index: {}]
  %s2 = inlined_call_operand.vmem [shape: s32[1,1,128], index: 2, kind: input, shape index: {}]
  %s3 = inlined_call_operand.hbm [shape: f32[2,1,8,128], index: 3, kind: output, shape index: {}]
  %s4 = sld [smem:[#allocation0]]
  $region49: #{tpu_custom_call.1} parent=0
    _
  %s6 = ssub.s32 1, %s4
  %s7 = scalar_select 0, %s6, %s4
  $region1: #{tpu_custom_call.1} parent=0
    #allocation2 [shape = 'u8[65536]{0}', space=vmem, size = 0x10000, scoped, tag = 'input window, operand 0']
    #allocation3 [shape = 's32[2]{0}', space=sflag, size = 0x8, scoped, tag = 'scoped memory for tpu_custom_call.1']
    #allocation4 [shape = 's32[2]{0}', space=sflag, size = 0x8, scoped, tag = 'scoped memory for tpu_custom_call.1']
    #allocation5 [shape = 'u8[8192]{0}', space=vmem, size = 0x2000, scoped, tag = 'output window, operand 0']
    %8 = vsyncpa [#allocation3], 0
    %s9 = scalar_lea.sflag [#allocation3], 1
    %10 = vsyncpa %s9, 0
    %11 = vsyncpa [#allocation4], 0
    %s12 = scalar_lea.sflag [#allocation4], 1
    %13 = vsyncpa %s12, 0
    loop: start=0, step=1, limit=4
    $region2: #{tpu_custom_call.1} parent=1 // loop_pre_header
      _
    $region3: #{tpu_custom_call.1} parent=1 // loop_header
      %s15 = sphi 0, %s19
      %p16 = scmp.ge.s32.totalorder %s15, 4
      %s22 = sphi 0, %s34
      %s23 = sphi 0, %s30
      %s24 = sphi 0, %s22
      %s25 = sphi 0, %s23
      %s26 = sphi 0, %s24
      %s27 = sphi 0, %s25
      %s39 = sphi 0, %s41
      %s42 = sphi 0, %s39
      %s43 = sphi 0, %s42
      %s59 = sphi 0, %s43
      %s63 = sphi 0, %s63
      %s65 = sphi 0, %s63
      %s66 = sphi 0, %s65
      %s80 = sphi 0, %s66
      %s84 = sphi 0, %s84
      %s86 = sphi 0, %s84
      %s87 = sphi 0, %s86
      %s101 = sphi 0, %s87
      %s109 = sphi 0, %s111
      %s112 = sphi 0, %s109
      %s113 = sphi 0, %s112
      %s129 = sphi 0, %s113
    $region4: #{tpu_custom_call.1} parent=1 // loop_header_branch
      %18 = sbr.rel (%p16) target = $region8
    $region5: #{tpu_custom_call.1} parent=1 // loop_body
      %s20 = ssub.s32 %s15, 1
      %s21 = ssub.s32 %s15, 2
      %s28 = sadd.s32 1, %s23
      %p29 = scmp.ge.s32.totalorder %s28, 1
      %s30 = scalar_select %p29, 0, %s28
      %s31 = sadd.s32 1, %s22
      %s32 = scalar_select %p29, %s31, %s22
      %p33 = scmp.ge.s32.totalorder %s32, 2
      %s34 = scalar_select %p33, 0, %s32
      %s35 = ssub.s32 %s22, %s34
      %s36 = ssub.s32 %s23, %s30
      %s37 = sor.u32 %s35, %s36
      %p38 = scmp.eq.s32.totalorder %s37, 0
      %s40 = sadd.s32 %s39, 1
      %s41 = scalar_select %p38, %s39, %s40
      %p44 = pneg %p38
      %p45 = scmp.eq.s32.totalorder %s15, 1
      %p46 = por %p44, %p45
      %p47 = scmp.ne.s32.totalorder %s39, %s42
      %p48 = scmp.eq.s32.totalorder %s15, 0
      %p49 = por %p47, %p48
      %p50 = scmp.ne.s32.totalorder %s39, %s42
      %p51 = scmp.eq.s32.totalorder %s20, 1
      %p52 = por %p50, %p51
      %p53 = scmp.ne.s32.totalorder %s42, %s43
      %p54 = scmp.eq.s32.totalorder %s20, 0
      %p55 = por %p53, %p54
      %p56 = scmp.ne.s32.totalorder %s42, %s43
      %p57 = scmp.eq.s32.totalorder %s21, 1
      %p58 = por %p56, %p57
      %p60 = scmp.ne.s32.totalorder %s43, %s59
      %p61 = scmp.eq.s32.totalorder %s21, 0
      %p62 = por %p60, %p61
      %s64 = sadd.s32 %s63, 1
      %p67 = scmp.eq.s32.totalorder %s15, 1
      %p68 = scmp.ne.s32.totalorder %s63, %s65
      %p69 = scmp.eq.s32.totalorder %s15, 0
      %p70 = por %p68, %p69
      %p71 = scmp.ne.s32.totalorder %s63, %s65
      %p72 = scmp.eq.s32.totalorder %s20, 1
      %p73 = por %p71, %p72
      %p74 = scmp.ne.s32.totalorder %s65, %s66
      %p75 = scmp.eq.s32.totalorder %s20, 0
      %p76 = por %p74, %p75
      %p77 = scmp.ne.s32.totalorder %s65, %s66
      %p78 = scmp.eq.s32.totalorder %s21, 1
      %p79 = por %p77, %p78
      %p81 = scmp.ne.s32.totalorder %s66, %s80
      %p82 = scmp.eq.s32.totalorder %s21, 0
      %p83 = por %p81, %p82
      %s85 = sadd.s32 %s84, 1
      %p88 = scmp.eq.s32.totalorder %s15, 1
      %p89 = scmp.ne.s32.totalorder %s84, %s86
      %p90 = scmp.eq.s32.totalorder %s15, 0
      %p91 = por %p89, %p90
      %p92 = scmp.ne.s32.totalorder %s84, %s86
      %p93 = scmp.eq.s32.totalorder %s20, 1
      %p94 = por %p92, %p93
      %p95 = scmp.ne.s32.totalorder %s86, %s87
      %p96 = scmp.eq.s32.totalorder %s20, 0
      %p97 = por %p95, %p96
      %p98 = scmp.ne.s32.totalorder %s86, %s87
      %p99 = scmp.eq.s32.totalorder %s21, 1
      %p100 = por %p98, %p99
      %p102 = scmp.ne.s32.totalorder %s87, %s101
      %p103 = scmp.eq.s32.totalorder %s21, 0
      %p104 = por %p102, %p103
      %s105 = ssub.s32 %s22, %s34
      %s106 = ssub.s32 %s23, %s30
      %s107 = sor.u32 %s105, %s106
      %p108 = scmp.eq.s32.totalorder %s107, 0
      %s110 = sadd.s32 %s109, 1
      %s111 = scalar_select %p108, %s109, %s110
      %p114 = pneg %p108
      %p115 = scmp.eq.s32.totalorder %s15, 1
      %p116 = por %p114, %p115
      %p117 = scmp.ne.s32.totalorder %s109, %s112
      %p118 = scmp.eq.s32.totalorder %s15, 0
      %p119 = por %p117, %p118
      %p120 = scmp.ne.s32.totalorder %s109, %s112
      %p121 = scmp.eq.s32.totalorder %s20, 1
      %p122 = por %p120, %p121
      %p123 = scmp.ne.s32.totalorder %s112, %s113
      %p124 = scmp.eq.s32.totalorder %s20, 0
      %p125 = por %p123, %p124
      %p126 = scmp.ne.s32.totalorder %s112, %s113
      %p127 = scmp.eq.s32.totalorder %s21, 1
      %p128 = por %p126, %p127
      %p130 = scmp.ne.s32.totalorder %s113, %s129
      %p131 = scmp.eq.s32.totalorder %s21, 0
      %p132 = por %p130, %p131
      %p133 = scmp.le.s32.totalorder 1, %s15
      %p134 = scmp.lt.s32.totalorder %s15, 3
      %p135 = pnand %p133, %p134
      %p136 = pneg %p135
      // Predicated region
      $region9: #{tpu_custom_call.1} parent=5 // pred_check
        _
      $region10: #{tpu_custom_call.1} parent=5 // pred_check_branch
        %138 = sbr.rel (%p135) target = $region12
      $region11: #{tpu_custom_call.1} parent=5 // pred_region
        %s139 = ssub.s32 %s15, 1
        // Predicated region
        $region13: #{tpu_custom_call.1} parent=11 // pred_check
          %p140 = pneg %p76
        $region14: #{tpu_custom_call.1} parent=11 // pred_check_branch
          %142 = sbr.rel (%p140) target = $region16
        $region15: #{tpu_custom_call.1} parent=11 // pred_region
          _
        $region16: #{tpu_custom_call.1} parent=11 // pred_fallthru
          _
        // Predicated region
        $region17: #{tpu_custom_call.1} parent=11 // pred_check
          %p143 = pneg %p97
        $region18: #{tpu_custom_call.1} parent=11 // pred_check_branch
          %145 = sbr.rel (%p143) target = $region20
        $region19: #{tpu_custom_call.1} parent=11 // pred_region
          _
        $region20: #{tpu_custom_call.1} parent=11 // pred_fallthru
          _
      $region12: #{tpu_custom_call.1} parent=5 // pred_fallthru
        _
      %p146 = scmp.lt.s32.totalorder %s15, 2
      // Predicated region
      $region21: #{tpu_custom_call.1} parent=5 // pred_check
        %p147 = pneg %p146
      $region22: #{tpu_custom_call.1} parent=5 // pred_check_branch
        %149 = sbr.rel (%p147) target = $region24
      $region23: #{tpu_custom_call.1} parent=5 // pred_region
        // Predicated region
        $region25: #{tpu_custom_call.1} parent=23 // pred_check
          %p150 = pneg %p49
        $region26: #{tpu_custom_call.1} parent=23 // pred_check_branch
          %152 = sbr.rel (%p150) target = $region28
        $region27: #{tpu_custom_call.1} parent=23 // pred_region
          %s153 = sand.u32 %s39, 1
          %s154 = scalar_lea.sflag [#allocation3], %s153
          %s155 = sand.u32 %s39, 1
          %s156 = smul.addr %s155, 64
          %s157 = scalar_lea.vmem [#allocation2], %s156
          %s158 = smul.u32 4, %s23
          %s160 = ssub.s32 1024, 1024
          %161 = vsyncadd %s154, %s160
          %s162 = smul.addr %s158, 2
          %s163 = smul.addr %s22, 8
          %s164 = sadd.s32 %s162, %s163
          %s165 = smul.addr %s164, 128
          %s166 = scalar_lea.hbm %s0, %s165
          %s167 = sshll.u32 %s157, 4
          %s168 = int_to_ptr.vmem [resolvable:$true] %s167
          %173 = dma.hbm_to_vmem [thread:$0]  %s166, 1024, %s168, %s154, 128, 128, 8
        $region28: #{tpu_custom_call.1} parent=23 // pred_fallthru
          _
      $region24: #{tpu_custom_call.1} parent=5 // pred_fallthru
        _
      %p174 = scmp.le.s32.totalorder 1, %s15
      %p175 = scmp.lt.s32.totalorder %s15, 3
      %p176 = pnand %p174, %p175
      %p177 = pneg %p176
      // Predicated region
      $region29: #{tpu_custom_call.1} parent=5 // pred_check
        _
      $region30: #{tpu_custom_call.1} parent=5 // pred_check_branch
        %179 = sbr.rel (%p176) target = $region32
      $region31: #{tpu_custom_call.1} parent=5 // pred_region
        %s180 = ssub.s32 %s15, 1
        %s181 = sand.u32 %s42, 1
        %s182 = scalar_lea.sflag [#allocation3], %s181
        %s183 = sand.u32 %s42, 1
        %s184 = smul.addr %s183, 64
        %s185 = scalar_lea.vmem [#allocation2], %s184
        // Predicated region
        $region33: #{tpu_custom_call.1} parent=31 // pred_check
          %p186 = pneg %p55
        $region34: #{tpu_custom_call.1} parent=31 // pred_check_branch
          %188 = sbr.rel (%p186) target = $region36
        $region35: #{tpu_custom_call.1} parent=31 // pred_region
          %189 = dma.done %s182, 1024
        $region36: #{tpu_custom_call.1} parent=31 // pred_fallthru
          _
        %s190 = sand.u32 %s42, 1
        %s191 = scalar_lea.sflag [#allocation3], %s190
        %s192 = sand.u32 %s42, 1
        %s193 = smul.addr %s192, 64
        %s194 = scalar_lea.vmem [#allocation2], %s193
        %p195 = pneg %p55
        %p196 = pneg %p52
        %p197 = pneg %p76
        %p198 = pneg %p73
        %p199 = pneg %p97
        %p200 = pneg %p94
        %p201 = pneg %p125
        %p202 = pneg %p122
        %s203 = sand.u32 %s112, 1
        %s204 = scalar_lea.sflag [#allocation4], %s203
        %s205 = sand.u32 %s112, 1
        %s206 = smul.addr %s205, 8
        %s207 = scalar_lea.vmem [#allocation5], %s206
        %s208 = smul.u32 4, %s25
        %v209 = vld [vmem:[%s185] sm:$0xff]
        %v210 = vld [vmem:[%s185 + $0x8] sm:$0xff]
        %v211 = vld [vmem:[%s185 + $0x10] sm:$0xff]
        %v212 = vld [vmem:[%s185 + $0x18] sm:$0xff]
        %v213 = vld [vmem:[%s185 + $0x20] sm:$0xff]
        %v214 = vld [vmem:[%s185 + $0x28] sm:$0xff]
        %v215 = vld [vmem:[%s185 + $0x30] sm:$0xff]
        %v216 = vld [vmem:[%s185 + $0x38] sm:$0xff]
        %v217 = vld [vmem:[%s1] sm:$0xff]
        %v218 = vld [vmem:[%s1 + $0x8] sm:$0xff]
        %v219 = vld [vmem:[%s2] sm:$0x1]
        %220 = vrot.lane.b32.xlu0 %v209, 127
        %v221 = vpop.permute.xlu0 %220
        %222 = vrot.lane.b32.xlu0 %v210, 127
        %v223 = vpop.permute.xlu0 %222
        %224 = vrot.lane.b32.xlu0 %v211, 127
        %v225 = vpop.permute.xlu0 %224
        %226 = vrot.lane.b32.xlu0 %v212, 127
        %v227 = vpop.permute.xlu0 %226
        %228 = vrot.lane.b32.xlu0 %v213, 127
        %v229 = vpop.permute.xlu0 %228
        %230 = vrot.lane.b32.xlu0 %v214, 127
        %v231 = vpop.permute.xlu0 %230
        %232 = vrot.lane.b32.xlu0 %v215, 127
        %v233 = vpop.permute.xlu0 %232
        %234 = vrot.lane.b32.xlu0 %v216, 127
        %v235 = vpop.permute.xlu0 %234
        %v236 = vrot.slane %v209, 1
        %v237 = vrot.slane %v211, 1
        %v238 = vrot.slane %v213, 1
        %v239 = vrot.slane %v215, 1
        %v240 = vrot.slane %v210, 1
        %v241 = vrot.slane %v212, 1
        %v242 = vrot.slane %v214, 1
        %v243 = vrot.slane %v216, 1
        %v244 = vlaneseq
        %v245 = vshrl.u32 %v244, 7
        %vm246 = vcmp.lt.s32.totalorder %v245, 7
        %v247 = vsel %vm246, %v236, %v240
        %v248 = vsel %vm246, %v237, %v241
        %v249 = vsel %vm246, %v238, %v242
        %v250 = vsel %vm246, %v239, %v243
        %v251 = vsel %vm246, %v240, %v236
        %v252 = vsel %vm246, %v241, %v237
        %v253 = vsel %vm246, %v242, %v238
        %v254 = vsel %vm246, %v243, %v239
        %vm255 = vcmp.lt.s32.totalorder %v217, 15
        %vm256 = vcmp.lt.s32.totalorder %v218, 15
        %v257 = vsel %vm255, 1, 0
        %v258 = vsel %vm256, 1, 0
        %259 = vset.pattern.permute.xlu0 0
        %260 = vperm.xlu0 %259, %v257
        %v261 = vpop.permute.xlu0 %260
        %262 = vset.pattern.permute.xlu0 0
        %263 = vperm.xlu0 %262, %v258
        %v264 = vpop.permute.xlu0 %263
        %vm265 = vcmp.eq.s32.totalorder %v261, 1
        %vm266 = vcmp.eq.s32.totalorder %v264, 1
        %v267 = vsel %vm265, %v247, 0.0
        %v268 = vsel %vm266, %v251, 0.0
        %v269 = vsel %vm265, %v248, 0.0
        %v270 = vsel %vm266, %v252, 0.0
        %v271 = vsel %vm265, %v249, 0.0
        %v272 = vsel %vm266, %v253, 0.0
        %v273 = vsel %vm265, %v250, 0.0
        %v274 = vsel %vm266, %v254, 0.0
        %275 = vrot.lane.b32.xlu0 %v209, 1
        %v276 = vpop.permute.xlu0 %275
        %277 = vrot.lane.b32.xlu0 %v210, 1
        %v278 = vpop.permute.xlu0 %277
        %279 = vrot.lane.b32.xlu0 %v211, 1
        %v280 = vpop.permute.xlu0 %279
        %281 = vrot.lane.b32.xlu0 %v212, 1
        %v282 = vpop.permute.xlu0 %281
        %283 = vrot.lane.b32.xlu0 %v213, 1
        %v284 = vpop.permute.xlu0 %283
        %285 = vrot.lane.b32.xlu0 %v214, 1
        %v286 = vpop.permute.xlu0 %285
        %287 = vrot.lane.b32.xlu0 %v215, 1
        %v288 = vpop.permute.xlu0 %287
        %289 = vrot.lane.b32.xlu0 %v216, 1
        %v290 = vpop.permute.xlu0 %289
        %v291 = vrot.slane %v209, 7
        %v292 = vrot.slane %v211, 7
        %v293 = vrot.slane %v213, 7
        %v294 = vrot.slane %v215, 7
        %v295 = vrot.slane %v210, 7
        %v296 = vrot.slane %v212, 7
        %v297 = vrot.slane %v214, 7
        %v298 = vrot.slane %v216, 7
        %vm299 = vcmp.lt.s32.totalorder %v245, 1
        %v300 = vsel %vm299, %v291, %v295
        %v301 = vsel %vm299, %v292, %v296
        %v302 = vsel %vm299, %v293, %v297
        %v303 = vsel %vm299, %v294, %v298
        %v304 = vsel %vm299, %v295, %v291
        %v305 = vsel %vm299, %v296, %v292
        %v306 = vsel %vm299, %v297, %v293
        %v307 = vsel %vm299, %v298, %v294
        %vm308 = vcmp.ge.s32.totalorder %v217, 1
        %vm309 = vcmp.ge.s32.totalorder %v218, 1
        %v310 = vsel %vm308, 1, 0
        %v311 = vsel %vm309, 1, 0
        %312 = vset.pattern.permute.xlu0 0
        %313 = vperm.xlu0 %312, %v310
        %v314 = vpop.permute.xlu0 %313
        %315 = vset.pattern.permute.xlu0 0
        %316 = vperm.xlu0 %315, %v311
        %v317 = vpop.permute.xlu0 %316
        %vm318 = vcmp.eq.s32.totalorder %v314, 1
        %vm319 = vcmp.eq.s32.totalorder %v317, 1
        %v320 = vsel %vm318, %v304, 0.0
        %v321 = vsel %vm319, %v300, 0.0
        %v322 = vsel %vm318, %v305, 0.0
        %v323 = vsel %vm319, %v301, 0.0
        %v324 = vsel %vm318, %v306, 0.0
        %v325 = vsel %vm319, %v302, 0.0
        %v326 = vsel %vm318, %v307, 0.0
        %v327 = vsel %vm319, %v303, 0.0
        %v328 = vadd.f32 %v221, %v276
        %v329 = vadd.f32 %v223, %v278
        %v330 = vadd.f32 %v225, %v280
        %v331 = vadd.f32 %v227, %v282
        %v332 = vadd.f32 %v229, %v284
        %v333 = vadd.f32 %v231, %v286
        %v334 = vadd.f32 %v233, %v288
        %v335 = vadd.f32 %v235, %v290
        %v336 = vadd.f32 %v267, %v320
        %v337 = vadd.f32 %v268, %v321
        %v338 = vadd.f32 %v269, %v322
        %v339 = vadd.f32 %v270, %v323
        %v340 = vadd.f32 %v271, %v324
        %v341 = vadd.f32 %v272, %v325
        %v342 = vadd.f32 %v273, %v326
        %v343 = vadd.f32 %v274, %v327
        %v344 = vmul.f32 %v328, -0.5
        %v345 = vmul.f32 %v329, -0.5
        %v346 = vmul.f32 %v330, -0.5
        %v347 = vmul.f32 %v331, -0.5
        %v348 = vmul.f32 %v332, -0.5
        %v349 = vmul.f32 %v333, -0.5
        %v350 = vmul.f32 %v334, -0.5
        %v351 = vmul.f32 %v335, -0.5
        %v352 = vadd.f32 %v209, %v344
        %v353 = vadd.f32 %v210, %v345
        %v354 = vadd.f32 %v211, %v346
        %v355 = vadd.f32 %v212, %v347
        %v356 = vadd.f32 %v213, %v348
        %v357 = vadd.f32 %v214, %v349
        %v358 = vadd.f32 %v215, %v350
        %v359 = vadd.f32 %v216, %v351
        %v360 = vmul.f32 %v336, -0.5
        %v361 = vmul.f32 %v337, -0.5
        %v362 = vmul.f32 %v338, -0.5
        %v363 = vmul.f32 %v339, -0.5
        %v364 = vmul.f32 %v340, -0.5
        %v365 = vmul.f32 %v341, -0.5
        %v366 = vmul.f32 %v342, -0.5
        %v367 = vmul.f32 %v343, -0.5
        %v368 = vadd.f32 %v209, %v360
        %v369 = vadd.f32 %v210, %v361
        %v370 = vadd.f32 %v211, %v362
        %v371 = vadd.f32 %v212, %v363
        %v372 = vadd.f32 %v213, %v364
        %v373 = vadd.f32 %v214, %v365
        %v374 = vadd.f32 %v215, %v366
        %v375 = vadd.f32 %v216, %v367
        %v376 = vand.u32 2147483647, %v352
        %v377 = vand.u32 2147483647, %v353
        %v378 = vand.u32 2147483647, %v354
        %v379 = vand.u32 2147483647, %v355
        %v380 = vand.u32 2147483647, %v356
        %v381 = vand.u32 2147483647, %v357
        %v382 = vand.u32 2147483647, %v358
        %v383 = vand.u32 2147483647, %v359
        %v384 = vand.u32 2147483647, %v368
        %v385 = vand.u32 2147483647, %v369
        %v386 = vand.u32 2147483647, %v370
        %v387 = vand.u32 2147483647, %v371
        %v388 = vand.u32 2147483647, %v372
        %v389 = vand.u32 2147483647, %v373
        %v390 = vand.u32 2147483647, %v374
        %v391 = vand.u32 2147483647, %v375
        %v392 = vadd.f32 %v376, %v384
        %v393 = vadd.f32 %v377, %v385
        %v394 = vadd.f32 %v378, %v386
        %v395 = vadd.f32 %v379, %v387
        %v396 = vadd.f32 %v380, %v388
        %v397 = vadd.f32 %v381, %v389
        %v398 = vadd.f32 %v382, %v390
        %v399 = vadd.f32 %v383, %v391
        %vm400 = vcmp.lt.s32.totalorder %v219, 16
        %v401 = vsel %vm400, 1, 0
        %v402 = vlaneseq
        %v403 = vshrl.u32 %v402, 7
        %v404 = vsub.s32 0, %v403
        %v405 = vrot.slane %v401, %v404
        %vm406 = vcmp.eq.s32.totalorder %v405, 1
        %v407 = vsel %vm406, %v392, 0.0
        %v408 = vsel %vm406, %v393, 0.0
        %v409 = vsel %vm406, %v394, 0.0
        %v410 = vsel %vm406, %v395, 0.0
        %v411 = vsel %vm406, %v396, 0.0
        %v412 = vsel %vm406, %v397, 0.0
        %v413 = vsel %vm406, %v398, 0.0
        %v414 = vsel %vm406, %v399, 0.0
        %v415 = vadd.f32 %v407, %v409
        %v416 = vadd.f32 %v415, %v411
        %v417 = vadd.f32 %v416, %v413
        %v418 = vadd.f32 %v408, %v410
        %v419 = vadd.f32 %v418, %v412
        %v420 = vadd.f32 %v419, %v414
        %v421 = vadd.f32 %v417, %v420
        %422 = vst [vmem:[%s207] sm:$0xff] %v421
        %s423 = sand.u32 %s112, 1
        %s424 = scalar_lea.sflag [#allocation4], %s423
        %s425 = sand.u32 %s112, 1
        %s426 = smul.addr %s425, 8
        %s427 = scalar_lea.vmem [#allocation5], %s426
        // Predicated region
        $region37: #{tpu_custom_call.1} parent=31 // pred_check
          %p428 = pneg %p122
        $region38: #{tpu_custom_call.1} parent=31 // pred_check_branch
          %430 = sbr.rel (%p428) target = $region40
        $region39: #{tpu_custom_call.1} parent=31 // pred_region
          %s432 = ssub.s32 128, 128
          %433 = vsyncadd %s424, %s432
          %s434 = sadd.s32 %s25, %s24
          %s435 = smul.addr %s434, 128
          %s436 = scalar_lea.hbm %s3, %s435
          %s438 = sshll.u32 %s427, 4
          %s439 = int_to_ptr.vmem [resolvable:$true] %s438
          %441 = dma.vmem_to_hbm [thread:$0]  %s439, 128, %s436, %s424
        $region40: #{tpu_custom_call.1} parent=31 // pred_fallthru
          _
      $region32: #{tpu_custom_call.1} parent=5 // pred_fallthru
        _
      %p442 = scmp.le.s32.totalorder 2, %s15
      // Predicated region
      $region41: #{tpu_custom_call.1} parent=5 // pred_check
        %p443 = pneg %p442
      $region42: #{tpu_custom_call.1} parent=5 // pred_check_branch
        %445 = sbr.rel (%p443) target = $region44
      $region43: #{tpu_custom_call.1} parent=5 // pred_region
        %s446 = ssub.s32 %s15, 2
        // Predicated region
        $region45: #{tpu_custom_call.1} parent=43 // pred_check
          %p447 = pneg %p128
        $region46: #{tpu_custom_call.1} parent=43 // pred_check_branch
          %449 = sbr.rel (%p447) target = $region48
        $region47: #{tpu_custom_call.1} parent=43 // pred_region
          %s450 = sand.u32 %s113, 1
          %s451 = scalar_lea.sflag [#allocation4], %s450
          %s452 = sand.u32 %s113, 1
          %s453 = smul.addr %s452, 8
          %s454 = scalar_lea.vmem [#allocation5], %s453
          %455 = dma.done %s451, 128
        $region48: #{tpu_custom_call.1} parent=43 // pred_fallthru
          _
      $region44: #{tpu_custom_call.1} parent=5 // pred_fallthru
        _
    $region6: #{tpu_custom_call.1} parent=1 // loop_footer
      %s19 = sadd.s32 1, %s15
    $region7: #{tpu_custom_call.1} parent=1 // loop_footer_branch
      %14 = sbr.rel target = $region3
    $region8: #{tpu_custom_call.1} parent=1 // loop_exit
      _
    %456 = vsyncpa [#allocation3], 1
    %s457 = scalar_lea.sflag [#allocation3], 1
    %458 = vsyncpa %s457, 1
    %459 = vsyncpa [#allocation4], 1
    %s460 = scalar_lea.sflag [#allocation4], 1
    %461 = vsyncpa %s460, 1

</llo_original>
